<compile_context>
chip_gen: v6e
topology: v6e:2x2x1
jax: 0.10.0
libtpu: 0.0.40
codegen_flags: <defaults>
</compile_context>

<pallas_src>
import jax
import jax.numpy as jnp
from jax.experimental import pallas as pl
from jax.experimental.pallas import tpu as pltpu


def _round_up(x, m):
    return ((x + m - 1) // m) * m


def graphsage_kernel(self_ref, adj_ref, invdeg_ref, feat_ref,
                     w_self_ref, w_neigh_ref, cls_ref,
                     out_ref, neigh_acc):
    """One (batch-tile i, neighbor-tile k) grid step.

    self_ref   : (tB, F)   bf16  self features of the batch tile
    adj_ref    : (tB, tN)  bf16  0/1 adjacency tile (exact in bf16)
    invdeg_ref : (tB, 1)   f32   per-row 1/deg (0 for isolated nodes)
    feat_ref   : (tN, F)   bf16  node-feature-table tile
    w_self_ref : (F, E)    bf16  enc_w.T[:F]  (self half, pre-transposed)
    w_neigh_ref: (F, E)    bf16  enc_w.T[F:]  (neighbor half, pre-transposed)
    cls_ref    : (E, Cp)   bf16  classifier weight, pre-transposed, lane-padded
    out_ref    : (tB, Cp)  bf16  scores.t(), lane-dense
    neigh_acc  : (tB, E)   f32   lane-dense VMEM accumulator (E-space)
    """
    k = pl.program_id(1)                       # reduction over neighbor tiles

    @pl.when(k == 0)
    def _init():
        neigh_acc[...] = jnp.zeros_like(neigh_acc)

    # Project the feature tile into embedding space, then aggregate directly in
    # E-space:  sum_k adj_k @ (feat_k @ Wn) == (adj @ feat) @ Wn.  The extra
    # MXU work hides under the HBM-bound adjacency stream, and both the matmul
    # output and the accumulator stores are 128-lane dense (F=32 would only
    # fill 32 lanes).
    proj = jnp.dot(feat_ref[...], w_neigh_ref[...],
                   preferred_element_type=jnp.float32)              # (tN, E)
    neigh_acc[...] += jnp.dot(adj_ref[...], proj.astype(jnp.bfloat16),
                              preferred_element_type=jnp.float32)   # (tB, E)

    @pl.when(k == pl.num_programs(1) - 1)
    def _epilogue():
        # Mean aggregation: 1/deg applied in f32 (adjacency was exact 0/1 in
        # bf16, so no 1/deg quantization; isolated rows scale to exact zero).
        neigh = neigh_acc[...] * invdeg_ref[...]                    # (tB, E)
        # cat([self, neigh]) @ enc_w.T == self@w_self + neigh_E  — the neighbor
        # half is already folded into the E-space accumulator, so there is no
        # lane-axis concat and no f32<->bf16 round trip.
        h = jnp.dot(self_ref[...], w_self_ref[...],
                    preferred_element_type=jnp.float32) + neigh     # (tB, E)
        embeds = jnp.maximum(h, 0.0)                                # ReLU (f32)
        out_ref[...] = jnp.dot(embeds.astype(jnp.bfloat16), cls_ref[...],
                               preferred_element_type=jnp.float32
                               ).astype(out_ref.dtype)              # (tB, Cp)


def supervised_graphsage_forward(self_feats, adj, features, enc_w, cls_w,
                                 *, tile_b=256, tile_n=1024):
    """scores.t() of SupervisedGraphSage.forward for a batch of nodes.

    self_feats: (B, F) f32   features of the batch nodes
    adj       : (B, N) f32   (unnormalized) adjacency of batch nodes -> graph nodes
    features  : (N, F) f32   full node feature table
    enc_w     : (E, 2F) f32  encoder weight (acts on cat([self, neigh]))
    cls_w     : (C, E) f32   classifier weight
    returns   : (B, C) f32
    """
    B, F = self_feats.shape
    N = features.shape[0]
    E, twoF = enc_w.shape
    C = cls_w.shape[0]
    assert twoF == 2 * F and adj.shape == (B, N) and cls_w.shape == (C, E)

    bf16 = jnp.bfloat16

    # Host-side layout plumbing (one-time): split + pre-transpose the encoder
    # weight, pre-transpose + lane-pad the classifier so output stores are
    # unmasked 128-lane vst.
    Cp = _round_up(C, 128)
    w_t = enc_w.T.astype(bf16)                                       # (2F, E)
    w_self = w_t[:F]                                                 # (F, E)
    w_neigh = w_t[F:]                                                # (F, E)
    cls_t = jnp.pad(cls_w.T.astype(bf16), ((0, 0), (0, Cp - C)))     # (E, Cp)

    # Mean-aggregation normalization kept in f32 (and guards isolated nodes).
    deg = jnp.sum(adj, axis=1, keepdims=True)
    inv_deg = jnp.where(deg > 0, 1.0 / deg, 0.0).astype(jnp.float32)  # (B, 1)

    # Tiling: batch axis 'parallel' (megacore split), neighbor axis is the
    # 'arbitrary' reduction.  Larger tN cuts per-step overhead and feature
    # re-streaming; keep >= 2 batch tiles when possible so both v7x
    # TensorCores get work.
    tB = min(tile_b, _round_up(B, 8))
    Bp = _round_up(B, tB)
    if Bp // tB < 2 and B > 8:
        tB = _round_up(pl.cdiv(Bp, 2), 8)
        Bp = _round_up(B, tB)
    tN = min(tile_n, _round_up(N, 128))
    Np = _round_up(N, tN)

    self_p = jnp.pad(self_feats.astype(bf16), ((0, Bp - B), (0, 0)))   # (Bp, F)
    adj_p = jnp.pad(adj.astype(bf16), ((0, Bp - B), (0, Np - N)))      # (Bp, Np)
    invdeg_p = jnp.pad(inv_deg, ((0, Bp - B), (0, 0)))                 # (Bp, 1)
    feat_p = jnp.pad(features.astype(bf16), ((0, Np - N), (0, 0)))     # (Np, F)

    grid = (Bp // tB, Np // tN)

    out = pl.pallas_call(
        graphsage_kernel,
        out_shape=jax.ShapeDtypeStruct((Bp, Cp), jnp.bfloat16),
        grid_spec=pltpu.PrefetchScalarGridSpec(
            num_scalar_prefetch=0,
            grid=grid,
            in_specs=[
                pl.BlockSpec((tB, F), lambda i, k: (i, 0)),     # self feats
                pl.BlockSpec((tB, tN), lambda i, k: (i, k)),    # adjacency tile
                pl.BlockSpec((tB, 1), lambda i, k: (i, 0)),     # 1/deg
                pl.BlockSpec((tN, F), lambda i, k: (k, 0)),     # feature tile
                pl.BlockSpec((F, E), lambda i, k: (0, 0)),      # w_self (resident)
                pl.BlockSpec((F, E), lambda i, k: (0, 0)),      # w_neigh (resident)
                pl.BlockSpec((E, Cp), lambda i, k: (0, 0)),     # cls (resident)
            ],
            out_specs=pl.BlockSpec((tB, Cp), lambda i, k: (i, 0)),
            scratch_shapes=[pltpu.VMEM((tB, E), jnp.float32)],
        ),
        compiler_params=pltpu.CompilerParams(
            dimension_semantics=("parallel", "arbitrary"),
            vmem_limit_bytes=32 * 1024 * 1024),
    )(self_p, adj_p, invdeg_p, feat_p, w_self, w_neigh, cls_t)

    return out[:B, :C].astype(jnp.float32)


def xavier_uniform(key, shape):
    fan_out, fan_in = shape
    bound = (6.0 / (fan_in + fan_out)) ** 0.5
    return jax.random.uniform(key, shape, jnp.float32, -bound, bound)


if __name__ == "__main__":
    key = jax.random.PRNGKey(0)
    k_feat, k_adj, k_enc, k_cls, k_nodes = jax.random.split(key, 5)

    # Small synthetic graph / model sizes.
    num_total_nodes = 64     # nodes in the graph feature table
    feat_dim = 32            # raw feature dim
    embed_dim = 128          # enc.embed_dim
    num_classes = 8
    batch = 16               # len(nodes) in forward()

    features = jax.random.normal(k_feat, (num_total_nodes, feat_dim), jnp.float32)

    # Batch of node ids and their self features (gather is plain-JAX glue).
    nodes = jax.random.randint(k_nodes, (batch,), 0, num_total_nodes)
    self_feats = features[nodes]                                     # (B, F)

    # Dense 0/1 adjacency of the batch nodes (unnormalized; 1/deg is applied
    # in f32 inside the kernel).
    adj = (jax.random.uniform(k_adj, (batch, num_total_nodes)) < 0.2).astype(
        jnp.float32)
    adj = adj.at[jnp.arange(batch), nodes].set(1.0)                  # non-empty rows

    # Encoder weight (embed_dim, 2*feat_dim) and classifier weight (C, E).
    enc_w = xavier_uniform(k_enc, (embed_dim, 2 * feat_dim))
    cls_w = xavier_uniform(k_cls, (num_classes, embed_dim))

    # TODO(synk): neighbor *sampling* (random.sample in MeanAggregator) is
    # host-side python; represented here by the dense 0/1 adjacency.  For real
    # sparse graphs, replace the dense adj@feat reduction with a
    # scalar-prefetched neighbor-index gather (PrefetchScalarGridSpec /
    # manual make_async_copy) — the dense (B,N) adjacency stream is the
    # roofline limiter on every TPU generation.

    scores = supervised_graphsage_forward(self_feats, adj, features,
                                          enc_w, cls_w)
    scores = jax.block_until_ready(scores)

    # Reference in plain JAX matching the kernel's numerics: bf16 operands,
    # f32 accumulation, E-space aggregation order, f32 1/deg scale.
    P = jax.lax.Precision.HIGHEST
    bf = lambda x: x.astype(jnp.bfloat16).astype(jnp.float32)
    F = feat_dim
    w_t = enc_w.T
    deg = jnp.sum(adj, axis=1, keepdims=True)
    inv_deg = jnp.where(deg > 0, 1.0 / deg, 0.0)
    proj_ref = bf(jnp.dot(bf(features), bf(w_t[F:]), precision=P))       # (N, E)
    neigh_ref = inv_deg * jnp.dot(bf(adj), proj_ref, precision=P)        # (B, E)
    h_ref = jnp.dot(bf(self_feats), bf(w_t[:F]), precision=P) + neigh_ref
    embeds_ref = jnp.maximum(h_ref, 0.0)
    scores_ref = jnp.dot(bf(embeds_ref), bf(cls_w.T), precision=P)       # (B, C)

    assert scores.shape == (batch, num_classes)
    max_err = float(jnp.max(jnp.abs(scores - scores_ref)))
    assert jnp.allclose(scores, scores_ref, atol=2e-2, rtol=2e-2), max_err

    print("KERNEL_OK")
</pallas_src>

<mosaic_0001>
module attributes {stable_mosaic.version = 11 : i64} {
  func.func @graphsage_kernel(%arg0: i32, %arg1: i32, %arg2: memref<8x32xbf16, #tpu.memory_space<vmem>>, %arg3: memref<8x128xbf16, #tpu.memory_space<vmem>>, %arg4: memref<8x1xf32, #tpu.memory_space<vmem>>, %arg5: memref<128x32xbf16, #tpu.memory_space<vmem>>, %arg6: memref<32x128xbf16, #tpu.memory_space<vmem>>, %arg7: memref<32x128xbf16, #tpu.memory_space<vmem>>, %arg8: memref<128x128xbf16, #tpu.memory_space<vmem>>, %arg9: memref<8x128xbf16, #tpu.memory_space<vmem>>, %arg10: memref<8x128xf32, #tpu.memory_space<vmem>>) attributes {dimension_semantics = [#tpu.dimension_semantics<parallel>, #tpu.dimension_semantics<arbitrary>], iteration_bounds = array<i64: 2, 1>, scalar_prefetch = 0 : i64, scratch_operands = 1 : i64, tpu.core_type = #tpu.core_type<tc>, window_params = [{transform_indices = @transform_0, window_bounds = array<i64: 8, 32>}, {transform_indices = @transform_1, window_bounds = array<i64: 8, 128>}, {transform_indices = @transform_2, window_bounds = array<i64: 8, 1>}, {transform_indices = @transform_3, window_bounds = array<i64: 128, 32>}, {pipeline_mode = #tpu.pipeline_mode<synchronous>, transform_indices = @transform_4, window_bounds = array<i64: 32, 128>}, {pipeline_mode = #tpu.pipeline_mode<synchronous>, transform_indices = @transform_5, window_bounds = array<i64: 32, 128>}, {pipeline_mode = #tpu.pipeline_mode<synchronous>, transform_indices = @transform_6, window_bounds = array<i64: 128, 128>}, {transform_indices = @transform_7, window_bounds = array<i64: 8, 128>}]} {
    %c0_i32 = arith.constant 0 : i32
    %0 = arith.cmpi eq, %arg1, %c0_i32 : i32
    %1 = arith.extui %0 : i1 to i32
    %c0_i32_0 = arith.constant 0 : i32
    %2 = arith.cmpi ne, %1, %c0_i32_0 : i32
    scf.if %2 {
      %cst_13 = arith.constant 0.000000e+00 : f32
      %15 = vector.broadcast %cst_13 : f32 to vector<8x128xf32>
      %c0_14 = arith.constant 0 : index
      %c0_15 = arith.constant 0 : index
      %16 = vector.load %arg10[%c0_14, %c0_15] : memref<8x128xf32, #tpu.memory_space<vmem>>, vector<8x128xf32>
      tpu.vector_store %arg10[%c0_14, %c0_15], %15 {strides = array<i32>} : memref<8x128xf32, #tpu.memory_space<vmem>>, vector<8x128xf32>,
    } else {
    }
    %c0 = arith.constant 0 : index
    %c0_1 = arith.constant 0 : index
    %3 = vector.load %arg5[%c0, %c0_1] : memref<128x32xbf16, #tpu.memory_space<vmem>>, vector<128x32xbf16>
    %c0_2 = arith.constant 0 : index
    %c0_3 = arith.constant 0 : index
    %4 = vector.load %arg7[%c0_2, %c0_3] : memref<32x128xbf16, #tpu.memory_space<vmem>>, vector<32x128xbf16>
    %cst = arith.constant dense<0.000000e+00> : vector<128x128xf32>
    %5 = tpu.matmul %3, %4, %cst {dimension_numbers = #tpu.dot_dimension_numbers<[1], [0], [0], [1], [0, 0, 1, 1], [], []>} : vector<128x32xbf16>, vector<32x128xbf16>, vector<128x128xf32> -> vector<128x128xf32>
    %c0_4 = arith.constant 0 : index
    %c0_5 = arith.constant 0 : index
    %6 = vector.load %arg10[%c0_4, %c0_5] : memref<8x128xf32, #tpu.memory_space<vmem>>, vector<8x128xf32>
    %c0_6 = arith.constant 0 : index
    %c0_7 = arith.constant 0 : index
    %7 = vector.load %arg3[%c0_6, %c0_7] : memref<8x128xbf16, #tpu.memory_space<vmem>>, vector<8x128xbf16>
    %8 = arith.truncf %5 : vector<128x128xf32> to vector<128x128xbf16>
    %cst_8 = arith.constant dense<0.000000e+00> : vector<8x128xf32>
    %9 = tpu.matmul %7, %8, %cst_8 {dimension_numbers = #tpu.dot_dimension_numbers<[1], [0], [0], [1], [0, 0, 1, 1], [], []>} : vector<8x128xbf16>, vector<128x128xbf16>, vector<8x128xf32> -> vector<8x128xf32>
    %10 = arith.addf %6, %9 : vector<8x128xf32>
    %c0_9 = arith.constant 0 : index
    %c0_10 = arith.constant 0 : index
    %11 = vector.load %arg10[%c0_9, %c0_10] : memref<8x128xf32, #tpu.memory_space<vmem>>, vector<8x128xf32>
    tpu.vector_store %arg10[%c0_9, %c0_10], %10 {strides = array<i32>} : memref<8x128xf32, #tpu.memory_space<vmem>>, vector<8x128xf32>,
    %c0_i32_11 = arith.constant 0 : i32
    %12 = arith.cmpi eq, %arg1, %c0_i32_11 : i32
    %13 = arith.extui %12 : i1 to i32
    %c0_i32_12 = arith.constant 0 : i32
    %14 = arith.cmpi ne, %13, %c0_i32_12 : i32
    scf.if %14 {
      %c0_13 = arith.constant 0 : index
      %c0_14 = arith.constant 0 : index
      %15 = vector.load %arg10[%c0_13, %c0_14] : memref<8x128xf32, #tpu.memory_space<vmem>>, vector<8x128xf32>
      %c0_15 = arith.constant 0 : index
      %c0_16 = arith.constant 0 : index
      %16 = vector.load %arg4[%c0_15, %c0_16] : memref<8x1xf32, #tpu.memory_space<vmem>>, vector<8x1xf32>
      %17 = vector.broadcast %16 : vector<8x1xf32> to vector<8x128xf32>
      %18 = arith.mulf %15, %17 : vector<8x128xf32>
      %c0_17 = arith.constant 0 : index
      %c0_18 = arith.constant 0 : index
      %19 = vector.load %arg2[%c0_17, %c0_18] : memref<8x32xbf16, #tpu.memory_space<vmem>>, vector<8x32xbf16>
      %c0_19 = arith.constant 0 : index
      %c0_20 = arith.constant 0 : index
      %20 = vector.load %arg6[%c0_19, %c0_20] : memref<32x128xbf16, #tpu.memory_space<vmem>>, vector<32x128xbf16>
      %cst_21 = arith.constant dense<0.000000e+00> : vector<8x128xf32>
      %21 = tpu.matmul %19, %20, %cst_21 {dimension_numbers = #tpu.dot_dimension_numbers<[1], [0], [0], [1], [0, 0, 1, 1], [], []>} : vector<8x32xbf16>, vector<32x128xbf16>, vector<8x128xf32> -> vector<8x128xf32>
      %22 = arith.addf %21, %18 : vector<8x128xf32>
      %cst_22 = arith.constant 0.000000e+00 : f32
      %23 = vector.broadcast %cst_22 : f32 to vector<8x128xf32>
      %24 = arith.maximumf %22, %23 : vector<8x128xf32>
      %25 = arith.truncf %24 : vector<8x128xf32> to vector<8x128xbf16>
      %c0_23 = arith.constant 0 : index
      %c0_24 = arith.constant 0 : index
      %26 = vector.load %arg8[%c0_23, %c0_24] : memref<128x128xbf16, #tpu.memory_space<vmem>>, vector<128x128xbf16>
      %cst_25 = arith.constant dense<0.000000e+00> : vector<8x128xf32>
      %27 = tpu.matmul %25, %26, %cst_25 {dimension_numbers = #tpu.dot_dimension_numbers<[1], [0], [0], [1], [0, 0, 1, 1], [], []>} : vector<8x128xbf16>, vector<128x128xbf16>, vector<8x128xf32> -> vector<8x128xf32>
      %28 = arith.truncf %27 : vector<8x128xf32> to vector<8x128xbf16>
      %c0_26 = arith.constant 0 : index
      %c0_27 = arith.constant 0 : index
      %29 = vector.load %arg9[%c0_26, %c0_27] : memref<8x128xbf16, #tpu.memory_space<vmem>>, vector<8x128xbf16>
      tpu.vector_store %arg9[%c0_26, %c0_27], %28 {strides = array<i32>} : memref<8x128xbf16, #tpu.memory_space<vmem>>, vector<8x128xbf16>,
    } else {
    }
    return
  }
  func.func @transform_0(%arg0: i32, %arg1: i32) -> (i32, i32) {
    %c0_i32 = arith.constant 0 : i32
    %c0_i32_0 = arith.constant 0 : i32
    return %arg0, %c0_i32 : i32, i32
  }
  func.func @transform_1(%arg0: i32, %arg1: i32) -> (i32, i32) {
    %c0_i32 = arith.constant 0 : i32
    return %arg0, %arg1 : i32, i32
  }
  func.func @transform_2(%arg0: i32, %arg1: i32) -> (i32, i32) {
    %c0_i32 = arith.constant 0 : i32
    %c0_i32_0 = arith.constant 0 : i32
    return %arg0, %c0_i32 : i32, i32
  }
  func.func @transform_3(%arg0: i32, %arg1: i32) -> (i32, i32) {
    %c0_i32 = arith.constant 0 : i32
    %c0_i32_0 = arith.constant 0 : i32
    return %arg1, %c0_i32 : i32, i32
  }
  func.func @transform_4(%arg0: i32, %arg1: i32) -> (i32, i32) {
    %c0_i32 = arith.constant 0 : i32
    %c0_i32_0 = arith.constant 0 : i32
    %c0_i32_1 = arith.constant 0 : i32
    return %c0_i32, %c0_i32_0 : i32, i32
  }
  func.func @transform_5(%arg0: i32, %arg1: i32) -> (i32, i32) {
    %c0_i32 = arith.constant 0 : i32
    %c0_i32_0 = arith.constant 0 : i32
    %c0_i32_1 = arith.constant 0 : i32
    return %c0_i32, %c0_i32_0 : i32, i32
  }
  func.func @transform_6(%arg0: i32, %arg1: i32) -> (i32, i32) {
    %c0_i32 = arith.constant 0 : i32
    %c0_i32_0 = arith.constant 0 : i32
    %c0_i32_1 = arith.constant 0 : i32
    return %c0_i32, %c0_i32_0 : i32, i32
  }
  func.func @transform_7(%arg0: i32, %arg1: i32) -> (i32, i32) {
    %c0_i32 = arith.constant 0 : i32
    %c0_i32_0 = arith.constant 0 : i32
    return %arg0, %c0_i32 : i32, i32
  }
}

</mosaic_0001>

<llo_original>
// kernel: tpu_custom_call.1
$region0: #{tpu_custom_call.1}
  #allocation0 [shape = 'u32[]', space=smem, size = 0x4, offset = 0x4, fixed_abs, tag = 'smem constant byte address 0x4 - core index']
  #allocation1 [shape = 'u32[144,128]{1,0:T(1,128)}', space=vmem, size = 0x12000, scoped, tag = 'internal scratch']
  #allocation2 [shape = 'f32[8,128]{1,0:T(8,128)}', space=vmem, size = 0x1000, scoped, tag = 'scratch operand']
  %s0 = inlined_call_operand.vmem [shape: bf16[16,32], index: 0, kind: input, shape index: {}]
  %s1 = inlined_call_operand.hbm [shape: bf16[16,128], index: 1, kind: input, shape index: {}]
  %s2 = inlined_call_operand.vmem [shape: f32[16,1], index: 2, kind: input, shape index: {}]
  %s3 = inlined_call_operand.vmem [shape: bf16[128,32], index: 3, kind: input, shape index: {}]
  %s4 = inlined_call_operand.vmem [shape: bf16[32,128], index: 4, kind: input, shape index: {}]
  %s5 = inlined_call_operand.vmem [shape: bf16[32,128], index: 5, kind: input, shape index: {}]
  %s6 = inlined_call_operand.vmem [shape: bf16[128,128], index: 6, kind: input, shape index: {}]
  %s7 = inlined_call_operand.hbm [shape: bf16[16,128], index: 7, kind: output, shape index: {}]
  %s8 = sld [smem:[#allocation0]]
  $region73: #{tpu_custom_call.1} parent=0
    _
  %s10 = ssub.s32 1, %s8
  %s11 = scalar_select 0, %s10, %s8
  $region1: #{tpu_custom_call.1} parent=0
    #allocation3 [shape = 'u8[4096]{0}', space=vmem, size = 0x1000, scoped, tag = 'input window, operand 1']
    #allocation4 [shape = 's32[2]{0}', space=sflag, size = 0x8, scoped, tag = 'scoped memory for tpu_custom_call.1']
    #allocation5 [shape = 's32[2]{0}', space=sflag, size = 0x8, scoped, tag = 'scoped memory for tpu_custom_call.1']
    #allocation6 [shape = 'u8[4096]{0}', space=vmem, size = 0x1000, scoped, tag = 'output window, operand 0']
    %12 = vsyncpa [#allocation4], 0
    %s13 = scalar_lea.sflag [#allocation4], 1
    %14 = vsyncpa %s13, 0
    %15 = vsyncpa [#allocation5], 0
    %s16 = scalar_lea.sflag [#allocation5], 1
    %17 = vsyncpa %s16, 0
    loop: start=0, step=1, limit=4
    $region2: #{tpu_custom_call.1} parent=1 // loop_pre_header
      _
    $region3: #{tpu_custom_call.1} parent=1 // loop_header
      %s19 = sphi 0, %s23
      %p20 = scmp.ge.s32.totalorder %s19, 4
      %s26 = sphi 0, %s38
      %s27 = sphi 0, %s34
      %s28 = sphi 0, %s26
      %s29 = sphi 0, %s27
      %s30 = sphi 0, %s28
      %s31 = sphi 0, %s29
      %s41 = sphi 0, %s43
      %s44 = sphi 0, %s41
      %s45 = sphi 0, %s44
      %s61 = sphi 0, %s45
      %s69 = sphi 0, %s71
      %s72 = sphi 0, %s69
      %s73 = sphi 0, %s72
      %s89 = sphi 0, %s73
      %s95 = sphi 0, %s97
      %s98 = sphi 0, %s95
      %s99 = sphi 0, %s98
      %s115 = sphi 0, %s99
      %s121 = sphi 0, %s123
      %s124 = sphi 0, %s121
      %s125 = sphi 0, %s124
      %s141 = sphi 0, %s125
      %s145 = sphi 0, %s145
      %s147 = sphi 0, %s145
      %s148 = sphi 0, %s147
      %s162 = sphi 0, %s148
      %s166 = sphi 0, %s166
      %s168 = sphi 0, %s166
      %s169 = sphi 0, %s168
      %s183 = sphi 0, %s169
      %s187 = sphi 0, %s187
      %s189 = sphi 0, %s187
      %s190 = sphi 0, %s189
      %s204 = sphi 0, %s190
      %s210 = sphi 0, %s212
      %s213 = sphi 0, %s210
      %s214 = sphi 0, %s213
      %s230 = sphi 0, %s214
    $region4: #{tpu_custom_call.1} parent=1 // loop_header_branch
      %22 = sbr.rel (%p20) target = $region8
    $region5: #{tpu_custom_call.1} parent=1 // loop_body
      %s24 = ssub.s32 %s19, 1
      %s25 = ssub.s32 %s19, 2
      %s32 = sadd.s32 1, %s27
      %p33 = scmp.ge.s32.totalorder %s32, 1
      %s34 = scalar_select %p33, 0, %s32
      %s35 = sadd.s32 1, %s26
      %s36 = scalar_select %p33, %s35, %s26
      %p37 = scmp.ge.s32.totalorder %s36, 2
      %s38 = scalar_select %p37, 0, %s36
      %s39 = ssub.s32 %s26, %s38
      %p40 = scmp.eq.s32.totalorder %s39, 0
      %s42 = sadd.s32 %s41, 1
      %s43 = scalar_select %p40, %s41, %s42
      %p46 = pneg %p40
      %p47 = scmp.eq.s32.totalorder %s19, 1
      %p48 = por %p46, %p47
      %p49 = scmp.ne.s32.totalorder %s41, %s44
      %p50 = scmp.eq.s32.totalorder %s19, 0
      %p51 = por %p49, %p50
      %p52 = scmp.ne.s32.totalorder %s41, %s44
      %p53 = scmp.eq.s32.totalorder %s24, 1
      %p54 = por %p52, %p53
      %p55 = scmp.ne.s32.totalorder %s44, %s45
      %p56 = scmp.eq.s32.totalorder %s24, 0
      %p57 = por %p55, %p56
      %p58 = scmp.ne.s32.totalorder %s44, %s45
      %p59 = scmp.eq.s32.totalorder %s25, 1
      %p60 = por %p58, %p59
      %p62 = scmp.ne.s32.totalorder %s45, %s61
      %p63 = scmp.eq.s32.totalorder %s25, 0
      %p64 = por %p62, %p63
      %s65 = ssub.s32 %s26, %s38
      %s66 = ssub.s32 %s27, %s34
      %s67 = sor.u32 %s65, %s66
      %p68 = scmp.eq.s32.totalorder %s67, 0
      %s70 = sadd.s32 %s69, 1
      %s71 = scalar_select %p68, %s69, %s70
      %p74 = pneg %p68
      %p75 = scmp.eq.s32.totalorder %s19, 1
      %p76 = por %p74, %p75
      %p77 = scmp.ne.s32.totalorder %s69, %s72
      %p78 = scmp.eq.s32.totalorder %s19, 0
      %p79 = por %p77, %p78
      %p80 = scmp.ne.s32.totalorder %s69, %s72
      %p81 = scmp.eq.s32.totalorder %s24, 1
      %p82 = por %p80, %p81
      %p83 = scmp.ne.s32.totalorder %s72, %s73
      %p84 = scmp.eq.s32.totalorder %s24, 0
      %p85 = por %p83, %p84
      %p86 = scmp.ne.s32.totalorder %s72, %s73
      %p87 = scmp.eq.s32.totalorder %s25, 1
      %p88 = por %p86, %p87
      %p90 = scmp.ne.s32.totalorder %s73, %s89
      %p91 = scmp.eq.s32.totalorder %s25, 0
      %p92 = por %p90, %p91
      %s93 = ssub.s32 %s26, %s38
      %p94 = scmp.eq.s32.totalorder %s93, 0
      %s96 = sadd.s32 %s95, 1
      %s97 = scalar_select %p94, %s95, %s96
      %p100 = pneg %p94
      %p101 = scmp.eq.s32.totalorder %s19, 1
      %p102 = por %p100, %p101
      %p103 = scmp.ne.s32.totalorder %s95, %s98
      %p104 = scmp.eq.s32.totalorder %s19, 0
      %p105 = por %p103, %p104
      %p106 = scmp.ne.s32.totalorder %s95, %s98
      %p107 = scmp.eq.s32.totalorder %s24, 1
      %p108 = por %p106, %p107
      %p109 = scmp.ne.s32.totalorder %s98, %s99
      %p110 = scmp.eq.s32.totalorder %s24, 0
      %p111 = por %p109, %p110
      %p112 = scmp.ne.s32.totalorder %s98, %s99
      %p113 = scmp.eq.s32.totalorder %s25, 1
      %p114 = por %p112, %p113
      %p116 = scmp.ne.s32.totalorder %s99, %s115
      %p117 = scmp.eq.s32.totalorder %s25, 0
      %p118 = por %p116, %p117
      %s119 = ssub.s32 %s27, %s34
      %p120 = scmp.eq.s32.totalorder %s119, 0
      %s122 = sadd.s32 %s121, 1
      %s123 = scalar_select %p120, %s121, %s122
      %p126 = pneg %p120
      %p127 = scmp.eq.s32.totalorder %s19, 1
      %p128 = por %p126, %p127
      %p129 = scmp.ne.s32.totalorder %s121, %s124
      %p130 = scmp.eq.s32.totalorder %s19, 0
      %p131 = por %p129, %p130
      %p132 = scmp.ne.s32.totalorder %s121, %s124
      %p133 = scmp.eq.s32.totalorder %s24, 1
      %p134 = por %p132, %p133
      %p135 = scmp.ne.s32.totalorder %s124, %s125
      %p136 = scmp.eq.s32.totalorder %s24, 0
      %p137 = por %p135, %p136
      %p138 = scmp.ne.s32.totalorder %s124, %s125
      %p139 = scmp.eq.s32.totalorder %s25, 1
      %p140 = por %p138, %p139
      %p142 = scmp.ne.s32.totalorder %s125, %s141
      %p143 = scmp.eq.s32.totalorder %s25, 0
      %p144 = por %p142, %p143
      %s146 = sadd.s32 %s145, 1
      %p149 = scmp.eq.s32.totalorder %s19, 1
      %p150 = scmp.ne.s32.totalorder %s145, %s147
      %p151 = scmp.eq.s32.totalorder %s19, 0
      %p152 = por %p150, %p151
      %p153 = scmp.ne.s32.totalorder %s145, %s147
      %p154 = scmp.eq.s32.totalorder %s24, 1
      %p155 = por %p153, %p154
      %p156 = scmp.ne.s32.totalorder %s147, %s148
      %p157 = scmp.eq.s32.totalorder %s24, 0
      %p158 = por %p156, %p157
      %p159 = scmp.ne.s32.totalorder %s147, %s148
      %p160 = scmp.eq.s32.totalorder %s25, 1
      %p161 = por %p159, %p160
      %p163 = scmp.ne.s32.totalorder %s148, %s162
      %p164 = scmp.eq.s32.totalorder %s25, 0
      %p165 = por %p163, %p164
      %s167 = sadd.s32 %s166, 1
      %p170 = scmp.eq.s32.totalorder %s19, 1
      %p171 = scmp.ne.s32.totalorder %s166, %s168
      %p172 = scmp.eq.s32.totalorder %s19, 0
      %p173 = por %p171, %p172
      %p174 = scmp.ne.s32.totalorder %s166, %s168
      %p175 = scmp.eq.s32.totalorder %s24, 1
      %p176 = por %p174, %p175
      %p177 = scmp.ne.s32.totalorder %s168, %s169
      %p178 = scmp.eq.s32.totalorder %s24, 0
      %p179 = por %p177, %p178
      %p180 = scmp.ne.s32.totalorder %s168, %s169
      %p181 = scmp.eq.s32.totalorder %s25, 1
      %p182 = por %p180, %p181
      %p184 = scmp.ne.s32.totalorder %s169, %s183
      %p185 = scmp.eq.s32.totalorder %s25, 0
      %p186 = por %p184, %p185
      %s188 = sadd.s32 %s187, 1
      %p191 = scmp.eq.s32.totalorder %s19, 1
      %p192 = scmp.ne.s32.totalorder %s187, %s189
      %p193 = scmp.eq.s32.totalorder %s19, 0
      %p194 = por %p192, %p193
      %p195 = scmp.ne.s32.totalorder %s187, %s189
      %p196 = scmp.eq.s32.totalorder %s24, 1
      %p197 = por %p195, %p196
      %p198 = scmp.ne.s32.totalorder %s189, %s190
      %p199 = scmp.eq.s32.totalorder %s24, 0
      %p200 = por %p198, %p199
      %p201 = scmp.ne.s32.totalorder %s189, %s190
      %p202 = scmp.eq.s32.totalorder %s25, 1
      %p203 = por %p201, %p202
      %p205 = scmp.ne.s32.totalorder %s190, %s204
      %p206 = scmp.eq.s32.totalorder %s25, 0
      %p207 = por %p205, %p206
      %s208 = ssub.s32 %s26, %s38
      %p209 = scmp.eq.s32.totalorder %s208, 0
      %s211 = sadd.s32 %s210, 1
      %s212 = scalar_select %p209, %s210, %s211
      %p215 = pneg %p209
      %p216 = scmp.eq.s32.totalorder %s19, 1
      %p217 = por %p215, %p216
      %p218 = scmp.ne.s32.totalorder %s210, %s213
      %p219 = scmp.eq.s32.totalorder %s19, 0
      %p220 = por %p218, %p219
      %p221 = scmp.ne.s32.totalorder %s210, %s213
      %p222 = scmp.eq.s32.totalorder %s24, 1
      %p223 = por %p221, %p222
      %p224 = scmp.ne.s32.totalorder %s213, %s214
      %p225 = scmp.eq.s32.totalorder %s24, 0
      %p226 = por %p224, %p225
      %p227 = scmp.ne.s32.totalorder %s213, %s214
      %p228 = scmp.eq.s32.totalorder %s25, 1
      %p229 = por %p227, %p228
      %p231 = scmp.ne.s32.totalorder %s214, %s230
      %p232 = scmp.eq.s32.totalorder %s25, 0
      %p233 = por %p231, %p232
      %p234 = scmp.le.s32.totalorder 1, %s19
      %p235 = scmp.lt.s32.totalorder %s19, 3
      %p236 = pnand %p234, %p235
      %p237 = pneg %p236
      // Predicated region
      $region9: #{tpu_custom_call.1} parent=5 // pred_check
        _
      $region10: #{tpu_custom_call.1} parent=5 // pred_check_branch
        %239 = sbr.rel (%p236) target = $region12
      $region11: #{tpu_custom_call.1} parent=5 // pred_region
        %s240 = ssub.s32 %s19, 1
        // Predicated region
        $region13: #{tpu_custom_call.1} parent=11 // pred_check
          %p241 = pneg %p137
        $region14: #{tpu_custom_call.1} parent=11 // pred_check_branch
          %243 = sbr.rel (%p241) target = $region16
        $region15: #{tpu_custom_call.1} parent=11 // pred_region
          %s244 = smul.u32 16, %s29
          %p245 = scmp.lt.s32.totalorder %s244, 15
          %s246 = scalar_select %p245, %s244, 15
          %s247 = smul.addr %s246, 4
          %s248 = scalar_lea.vmem %s3, %s247
          %s249 = smul.u32 16, %s29
        $region16: #{tpu_custom_call.1} parent=11 // pred_fallthru
          _
        // Predicated region
        $region17: #{tpu_custom_call.1} parent=11 // pred_check
          %p250 = pneg %p158
        $region18: #{tpu_custom_call.1} parent=11 // pred_check_branch
          %252 = sbr.rel (%p250) target = $region20
        $region19: #{tpu_custom_call.1} parent=11 // pred_region
          _
        $region20: #{tpu_custom_call.1} parent=11 // pred_fallthru
          _
        // Predicated region
        $region21: #{tpu_custom_call.1} parent=11 // pred_check
          %p253 = pneg %p179
        $region22: #{tpu_custom_call.1} parent=11 // pred_check_branch
          %255 = sbr.rel (%p253) target = $region24
        $region23: #{tpu_custom_call.1} parent=11 // pred_region
          _
        $region24: #{tpu_custom_call.1} parent=11 // pred_fallthru
          _
        // Predicated region
        $region25: #{tpu_custom_call.1} parent=11 // pred_check
          %p256 = pneg %p200
        $region26: #{tpu_custom_call.1} parent=11 // pred_check_branch
          %258 = sbr.rel (%p256) target = $region28
        $region27: #{tpu_custom_call.1} parent=11 // pred_region
          _
        $region28: #{tpu_custom_call.1} parent=11 // pred_fallthru
          _
      $region12: #{tpu_custom_call.1} parent=5 // pred_fallthru
        _
      %p259 = scmp.lt.s32.totalorder %s19, 2
      // Predicated region
      $region29: #{tpu_custom_call.1} parent=5 // pred_check
        %p260 = pneg %p259
      $region30: #{tpu_custom_call.1} parent=5 // pred_check_branch
        %262 = sbr.rel (%p260) target = $region32
      $region31: #{tpu_custom_call.1} parent=5 // pred_region
        // Predicated region
        $region33: #{tpu_custom_call.1} parent=31 // pred_check
          %p263 = pneg %p51
        $region34: #{tpu_custom_call.1} parent=31 // pred_check_branch
          %265 = sbr.rel (%p263) target = $region36
        $region35: #{tpu_custom_call.1} parent=31 // pred_region
          %p266 = scmp.lt.s32.totalorder %s26, 1
          %s267 = scalar_select %p266, %s26, 1
          %s268 = smul.addr %s267, 4
          %s269 = scalar_lea.vmem %s0, %s268
        $region36: #{tpu_custom_call.1} parent=31 // pred_fallthru
          _
        // Predicated region
        $region37: #{tpu_custom_call.1} parent=31 // pred_check
          %p270 = pneg %p79
        $region38: #{tpu_custom_call.1} parent=31 // pred_check_branch
          %272 = sbr.rel (%p270) target = $region40
        $region39: #{tpu_custom_call.1} parent=31 // pred_region
          %s273 = sand.u32 %s69, 1
          %s274 = scalar_lea.sflag [#allocation4], %s273
          %s275 = sand.u32 %s69, 1
          %s276 = smul.addr %s275, 4
          %s277 = scalar_lea.vmem [#allocation3], %s276
          %s279 = ssub.s32 64, 64
          %280 = vsyncadd %s274, %s279
          %s281 = sadd.s32 %s27, %s26
          %s282 = smul.addr %s281, 64
          %s283 = scalar_lea.hbm %s1, %s282
          %s285 = sshll.u32 %s277, 4
          %s286 = int_to_ptr.vmem [resolvable:$true] %s285
          %288 = dma.hbm_to_vmem [thread:$0]  %s283, 64, %s286, %s274
        $region40: #{tpu_custom_call.1} parent=31 // pred_fallthru
          _
        // Predicated region
        $region41: #{tpu_custom_call.1} parent=31 // pred_check
          %p289 = pneg %p105
        $region42: #{tpu_custom_call.1} parent=31 // pred_check_branch
          %291 = sbr.rel (%p289) target = $region44
        $region43: #{tpu_custom_call.1} parent=31 // pred_region
          %p292 = scmp.lt.s32.totalorder %s26, 1
          %s293 = scalar_select %p292, %s26, 1
          %s294 = smul.addr %s293, 8
          %s295 = scalar_lea.vmem %s2, %s294
        $region44: #{tpu_custom_call.1} parent=31 // pred_fallthru
          _
      $region32: #{tpu_custom_call.1} parent=5 // pred_fallthru
        _
      %p296 = scmp.le.s32.totalorder 1, %s19
      %p297 = scmp.lt.s32.totalorder %s19, 3
      %p298 = pnand %p296, %p297
      %p299 = pneg %p298
      // Predicated region
      $region45: #{tpu_custom_call.1} parent=5 // pred_check
        _
      $region46: #{tpu_custom_call.1} parent=5 // pred_check_branch
        %301 = sbr.rel (%p298) target = $region48
      $region47: #{tpu_custom_call.1} parent=5 // pred_region
        %s302 = ssub.s32 %s19, 1
        %s303 = sand.u32 %s72, 1
        %s304 = scalar_lea.sflag [#allocation4], %s303
        %s305 = sand.u32 %s72, 1
        %s306 = smul.addr %s305, 4
        %s307 = scalar_lea.vmem [#allocation3], %s306
        // Predicated region
        $region49: #{tpu_custom_call.1} parent=47 // pred_check
          %p308 = pneg %p85
        $region50: #{tpu_custom_call.1} parent=47 // pred_check_branch
          %310 = sbr.rel (%p308) target = $region52
        $region51: #{tpu_custom_call.1} parent=47 // pred_region
          %311 = dma.done %s304, 64
        $region52: #{tpu_custom_call.1} parent=47 // pred_fallthru
          _
        %p312 = scmp.lt.s32.totalorder %s28, 1
        %s313 = scalar_select %p312, %s28, 1
        %s314 = smul.addr %s313, 4
        %s315 = scalar_lea.vmem %s0, %s314
        %p316 = pneg %p57
        %p317 = pneg %p54
        %s318 = sand.u32 %s72, 1
        %s319 = scalar_lea.sflag [#allocation4], %s318
        %s320 = sand.u32 %s72, 1
        %s321 = smul.addr %s320, 4
        %s322 = scalar_lea.vmem [#allocation3], %s321
        %p323 = pneg %p85
        %p324 = pneg %p82
        %p325 = scmp.lt.s32.totalorder %s28, 1
        %s326 = scalar_select %p325, %s28, 1
        %s327 = smul.addr %s326, 8
        %s328 = scalar_lea.vmem %s2, %s327
        %p329 = pneg %p111
        %p330 = pneg %p108
        %s331 = smul.u32 16, %s29
        %p332 = scmp.lt.s32.totalorder %s331, 15
        %s333 = scalar_select %p332, %s331, 15
        %s334 = smul.addr %s333, 4
        %s335 = scalar_lea.vmem %s3, %s334
        %p336 = pneg %p137
        %p337 = pneg %p134
        %p338 = pneg %p158
        %p339 = pneg %p155
        %p340 = pneg %p179
        %p341 = pneg %p176
        %p342 = pneg %p200
        %p343 = pneg %p197
        %p344 = pneg %p226
        %p345 = pneg %p223
        %s346 = sand.u32 %s213, 1
        %s347 = scalar_lea.sflag [#allocation5], %s346
        %s348 = sand.u32 %s213, 1
        %s349 = smul.addr %s348, 4
        %s350 = scalar_lea.vmem [#allocation6], %s349
        %p351 = scmp.lt.s32.totalorder %s28, 1
        %s352 = scalar_select %p351, %s28, 1
        %s353 = smul.addr %s352, 4
        %s354 = scalar_lea.vmem %s0, %s353
        %p355 = scmp.lt.s32.totalorder %s28, 1
        %s356 = scalar_select %p355, %s28, 1
        %s357 = smul.addr %s356, 8
        %s358 = scalar_lea.vmem %s2, %s357
        %s359 = smul.u32 16, %s29
        %p360 = scmp.lt.s32.totalorder %s359, 15
        %s361 = scalar_select %p360, %s359, 15
        %s362 = smul.addr %s361, 4
        %s363 = scalar_lea.vmem %s3, %s362
        %s364 = smul.u32 16, %s29
        %p366 = scmp.eq.s32.totalorder %s29, 0
        // Predicated region
        $region53: #{tpu_custom_call.1} parent=47 // pred_check
          %p367 = pneg %p366
        $region54: #{tpu_custom_call.1} parent=47 // pred_check_branch
          %369 = sbr.rel (%p367) target = $region56
        $region55: #{tpu_custom_call.1} parent=47 // pred_region
          %370 = vst [vmem:[#allocation2] sm:$0xff] 0.0
        $region56: #{tpu_custom_call.1} parent=47 // pred_fallthru
          _
        %v371 = vld [vmem:[%s363] sm:$0xf]
        %v372 = vld [vmem:[%s363 + $0x4] sm:$0xf]
        %v373 = vld [vmem:[%s363 + $0x8] sm:$0xf]
        %v374 = vld [vmem:[%s363 + $0xc] sm:$0xf]
        %v375 = vld [vmem:[%s363 + $0x10] sm:$0xf]
        %v376 = vld [vmem:[%s363 + $0x14] sm:$0xf]
        %v377 = vld [vmem:[%s363 + $0x18] sm:$0xf]
        %v378 = vld [vmem:[%s363 + $0x1c] sm:$0xf]
        %v379 = vld [vmem:[%s363 + $0x20] sm:$0xf]
        %v380 = vld [vmem:[%s363 + $0x24] sm:$0xf]
        %v381 = vld [vmem:[%s363 + $0x28] sm:$0xf]
        %v382 = vld [vmem:[%s363 + $0x2c] sm:$0xf]
        %v383 = vld [vmem:[%s363 + $0x30] sm:$0xf]
        %v384 = vld [vmem:[%s363 + $0x34] sm:$0xf]
        %v385 = vld [vmem:[%s363 + $0x38] sm:$0xf]
        %v386 = vld [vmem:[%s363 + $0x3c] sm:$0xf]
        %v387 = vld [vmem:[%s5] sm:$0xf]
        %v388 = vld [vmem:[%s5 + $0x4] sm:$0xf]
        %v389 = vld [vmem:[%s5 + $0x8] sm:$0xf]
        %v390 = vld [vmem:[%s5 + $0xc] sm:$0xf]
        %v407 = vunpack.c.l.b16 %v371
        %v408 = vunpack.c.l.b16 %v372
        %v409 = vunpack.c.l.b16 %v373
        %v410 = vunpack.c.l.b16 %v374
        %v411 = vunpack.c.l.b16 %v375
        %v412 = vunpack.c.l.b16 %v376
        %v413 = vunpack.c.l.b16 %v377
        %v414 = vunpack.c.l.b16 %v378
        %v415 = vunpack.c.l.b16 %v379
        %v416 = vunpack.c.l.b16 %v380
        %v417 = vunpack.c.l.b16 %v381
        %v418 = vunpack.c.l.b16 %v382
        %v419 = vunpack.c.l.b16 %v383
        %v420 = vunpack.c.l.b16 %v384
        %v421 = vunpack.c.l.b16 %v385
        %v422 = vunpack.c.l.b16 %v386
        %v423 = vpack.c.b16 %v408, %v407
        %v424 = vpack.c.b16 %v410, %v409
        %v425 = vpack.c.b16 %v412, %v411
        %v426 = vpack.c.b16 %v414, %v413
        %v427 = vpack.c.b16 %v416, %v415
        %v428 = vpack.c.b16 %v418, %v417
        %v429 = vpack.c.b16 %v420, %v419
        %v430 = vpack.c.b16 %v422, %v421
        %v435 = vunpack.c.l.b16 %v387
        %v436 = vunpack.c.l.b16 %v388
        %v437 = vunpack.c.l.b16 %v389
        %v438 = vunpack.c.l.b16 %v390
        %v439 = vpack.c.b16 %v436, %v435
        %v440 = vpack.c.b16 %v438, %v437
        %vm443 = vcmask 261120
        %v445 = vsel %vm443, %v423, 0
        %v448 = vsel %vm443, %v424, 0
        %v451 = vsel %vm443, %v425, 0
        %v454 = vsel %vm443, %v426, 0
        %v457 = vsel %vm443, %v427, 0
        %v460 = vsel %vm443, %v428, 0
        %v463 = vsel %vm443, %v429, 0
        %v466 = vsel %vm443, %v430, 0
        %468 = vmatprep.subr.bf16.mxu0 0
        %469 = vmatpush1.bf16.msra.mxu0 0
        %470 = vmatprep.subr.bf16.mxu0 0
        %471 = vmatpush1.bf16.msra.mxu0 0
        %472 = vmatprep.subr.bf16.mxu0 0
        %473 = vmatpush1.bf16.msra.mxu0 0
        %474 = vmatprep.subr.bf16.mxu0 0
        %475 = vmatpush1.bf16.msra.mxu0 0
        %476 = vmatprep.subr.bf16.mxu0 0
        %477 = vmatpush1.bf16.msra.mxu0 0
        %478 = vmatprep.subr.bf16.mxu0 0
        %479 = vmatpush1.bf16.msra.mxu0 0
        %480 = vmatprep.subr.bf16.mxu0 0
        %481 = vmatpush1.bf16.msra.mxu0 %v440
        %482 = vmatprep.subr.bf16.mxu0 0
        %483 = vmatpush1.bf16.msra.mxu0 %v439
        %484 = vmatprep.subr.bf16.mxu0 0
        %485 = vmatpush2.bf16.msra.mxu0 0
        %486 = vmatprep.subr.bf16.mxu0 0
        %487 = vmatpush2.bf16.msra.mxu0 0
        %488 = vmatprep.subr.bf16.mxu0 0
        %489 = vmatpush2.bf16.msra.mxu0 0
        %490 = vmatprep.subr.bf16.mxu0 0
        %491 = vmatpush2.bf16.msra.mxu0 0
        %492 = vmatprep.subr.bf16.mxu0 0
        %493 = vmatpush2.bf16.msra.mxu0 0
        %494 = vmatprep.subr.bf16.mxu0 0
        %495 = vmatpush2.bf16.msra.mxu0 0
        %496 = vmatprep.subr.bf16.mxu0 0
        %497 = vmatpush2.bf16.msra.mxu0 0
        %498 = vmatprep.subr.bf16.mxu0 0
        %499 = vmatpush2.bf16.msra.mxu0 0
        %500 = vmatprep.mubr.bf16.mxu0 0
        %501 = vmatmul.mubr.bf16.gmra.mxu0 %v445
        %v502 = vpop.f32.mrf.mxu0
        %v503 = vadd.f32 0.0, %v502
        %v504 = vpop.f32.mrf.mxu0
        %v505 = vpop.f32.mrf.mxu0
        %v506 = vadd.f32 0.0, %v505
        %v507 = vpop.f32.mrf.mxu0
        %508 = vmatprep.mubr.bf16.mxu0 0
        %509 = vmatmul.mubr.bf16.gmra.mxu0 %v448
        %v510 = vpop.f32.mrf.mxu0
        %v511 = vadd.f32 0.0, %v510
        %v512 = vpop.f32.mrf.mxu0
        %v513 = vpop.f32.mrf.mxu0
        %v514 = vadd.f32 0.0, %v513
        %v515 = vpop.f32.mrf.mxu0
        %516 = vmatprep.mubr.bf16.mxu0 0
        %517 = vmatmul.mubr.bf16.gmra.mxu0 %v451
        %v518 = vpop.f32.mrf.mxu0
        %v519 = vadd.f32 0.0, %v518
        %v520 = vpop.f32.mrf.mxu0
        %v521 = vpop.f32.mrf.mxu0
        %v522 = vadd.f32 0.0, %v521
        %v523 = vpop.f32.mrf.mxu0
        %524 = vmatprep.mubr.bf16.mxu0 0
        %525 = vmatmul.mubr.bf16.gmra.mxu0 %v454
        %v526 = vpop.f32.mrf.mxu0
        %v527 = vadd.f32 0.0, %v526
        %v528 = vpop.f32.mrf.mxu0
        %v529 = vpop.f32.mrf.mxu0
        %v530 = vadd.f32 0.0, %v529
        %v531 = vpop.f32.mrf.mxu0
        %532 = vmatprep.mubr.bf16.mxu0 0
        %533 = vmatmul.mubr.bf16.gmra.mxu0 %v457
        %v534 = vpop.f32.mrf.mxu0
        %v535 = vadd.f32 0.0, %v534
        %v536 = vpop.f32.mrf.mxu0
        %v537 = vpop.f32.mrf.mxu0
        %v538 = vadd.f32 0.0, %v537
        %v539 = vpop.f32.mrf.mxu0
        %540 = vmatprep.mubr.bf16.mxu0 0
        %541 = vmatmul.mubr.bf16.gmra.mxu0 %v460
        %v542 = vpop.f32.mrf.mxu0
        %v543 = vadd.f32 0.0, %v542
        %v544 = vpop.f32.mrf.mxu0
        %v545 = vpop.f32.mrf.mxu0
        %v546 = vadd.f32 0.0, %v545
        %v547 = vpop.f32.mrf.mxu0
        %548 = vmatprep.mubr.bf16.mxu0 0
        %549 = vmatmul.mubr.bf16.gmra.mxu0 %v463
        %v550 = vpop.f32.mrf.mxu0
        %v551 = vadd.f32 0.0, %v550
        %v552 = vpop.f32.mrf.mxu0
        %v553 = vpop.f32.mrf.mxu0
        %v554 = vadd.f32 0.0, %v553
        %v555 = vpop.f32.mrf.mxu0
        %556 = vmatprep.mubr.bf16.mxu0 0
        %557 = vmatmul.mubr.bf16.gmra.mxu0 %v466
        %v558 = vpop.f32.mrf.mxu0
        %v559 = vadd.f32 0.0, %v558
        %v560 = vpop.f32.mrf.mxu0
        %v561 = vpop.f32.mrf.mxu0
        %v562 = vadd.f32 0.0, %v561
        %v563 = vpop.f32.mrf.mxu0
        %564 = vdwg.mxu0
        %v565 = vld [vmem:[#allocation2] sm:$0xff]
        %v566 = vld [vmem:[%s307] sm:$0xf]
        %v567 = vpack.c.bf16 %v506, %v503
        %v568 = vpack.c.bf16 %v514, %v511
        %v569 = vpack.c.bf16 %v522, %v519
        %v570 = vpack.c.bf16 %v530, %v527
        %v571 = vpack.c.bf16 %v538, %v535
        %v572 = vpack.c.bf16 %v546, %v543
        %v573 = vpack.c.bf16 %v554, %v551
        %v574 = vpack.c.bf16 %v562, %v559
        %575 = vmatprep.subr.bf16.mxu0 0
        %576 = vmatpush1.bf16.msra.mxu0 %v574
        %577 = vmatprep.subr.bf16.mxu0 0
        %578 = vmatpush1.bf16.msra.mxu0 %v573
        %579 = vmatprep.subr.bf16.mxu0 0
        %580 = vmatpush1.bf16.msra.mxu0 %v572
        %581 = vmatprep.subr.bf16.mxu0 0
        %582 = vmatpush1.bf16.msra.mxu0 %v571
        %583 = vmatprep.subr.bf16.mxu0 0
        %584 = vmatpush1.bf16.msra.mxu0 %v570
        %585 = vmatprep.subr.bf16.mxu0 0
        %586 = vmatpush1.bf16.msra.mxu0 %v569
        %587 = vmatprep.subr.bf16.mxu0 0
        %588 = vmatpush1.bf16.msra.mxu0 %v568
        %589 = vmatprep.subr.bf16.mxu0 0
        %590 = vmatpush1.bf16.msra.mxu0 %v567
        %591 = vmatprep.subr.bf16.mxu0 0
        %592 = vmatpush2.bf16.msra.mxu0 0
        %593 = vmatprep.subr.bf16.mxu0 0
        %594 = vmatpush2.bf16.msra.mxu0 0
        %595 = vmatprep.subr.bf16.mxu0 0
        %596 = vmatpush2.bf16.msra.mxu0 0
        %597 = vmatprep.subr.bf16.mxu0 0
        %598 = vmatpush2.bf16.msra.mxu0 0
        %599 = vmatprep.subr.bf16.mxu0 0
        %600 = vmatpush2.bf16.msra.mxu0 0
        %601 = vmatprep.subr.bf16.mxu0 0
        %602 = vmatpush2.bf16.msra.mxu0 0
        %603 = vmatprep.subr.bf16.mxu0 0
        %604 = vmatpush2.bf16.msra.mxu0 0
        %605 = vmatprep.subr.bf16.mxu0 0
        %606 = vmatpush2.bf16.msra.mxu0 0
        %607 = vmatprep.mubr.bf16.mxu0 0
        %608 = vmatmul.mubr.bf16.gmra.mxu0 %v566
        %v609 = vpop.f32.mrf.mxu0
        %v610 = vadd.f32 0.0, %v609
        %v611 = vpop.f32.mrf.mxu0
        %v612 = vpop.f32.mrf.mxu0
        %v613 = vpop.f32.mrf.mxu0
        %614 = vdwg.mxu0
        %v615 = vadd.f32 %v565, %v610
        %616 = vst [vmem:[#allocation2] sm:$0xff] %v615
        // Predicated region
        $region57: #{tpu_custom_call.1} parent=47 // pred_check
          %p617 = pneg %p366
        $region58: #{tpu_custom_call.1} parent=47 // pred_check_branch
          %619 = sbr.rel (%p617) target = $region60
        $region59: #{tpu_custom_call.1} parent=47 // pred_region
          %v620 = vld [vmem:[#allocation2] sm:$0xff]
          %v621 = vld [vmem:[%s358] sm:$0xff]
          %623 = vset.pattern.permute.xlu0 0
          %624 = vperm.xlu0 %623, %v621
          %v625 = vpop.permute.xlu0 %624
          %v627 = vmul.f32 %v620, %v625
          %v628 = vld [vmem:[%s354] sm:$0xf]
          %v629 = vld [vmem:[%s4] sm:$0xf]
          %v630 = vld [vmem:[%s4 + $0x4] sm:$0xf]
          %v631 = vld [vmem:[%s4 + $0x8] sm:$0xf]
          %v632 = vld [vmem:[%s4 + $0xc] sm:$0xf]
          %v637 = vunpack.c.l.b16 %v629
          %v638 = vunpack.c.l.b16 %v630
          %v639 = vunpack.c.l.b16 %v631
          %v640 = vunpack.c.l.b16 %v632
          %v641 = vpack.c.b16 %v638, %v637
          %v642 = vpack.c.b16 %v640, %v639
          %v646 = vsel %vm443, %v628, 0
          %648 = vmatprep.subr.bf16.mxu0 0
          %649 = vmatpush1.bf16.msra.mxu0 0
          %650 = vmatprep.subr.bf16.mxu0 0
          %651 = vmatpush1.bf16.msra.mxu0 0
          %652 = vmatprep.subr.bf16.mxu0 0
          %653 = vmatpush1.bf16.msra.mxu0 0
          %654 = vmatprep.subr.bf16.mxu0 0
          %655 = vmatpush1.bf16.msra.mxu0 0
          %656 = vmatprep.subr.bf16.mxu0 0
          %657 = vmatpush1.bf16.msra.mxu0 0
          %658 = vmatprep.subr.bf16.mxu0 0
          %659 = vmatpush1.bf16.msra.mxu0 0
          %660 = vmatprep.subr.bf16.mxu0 0
          %661 = vmatpush1.bf16.msra.mxu0 %v642
          %662 = vmatprep.subr.bf16.mxu0 0
          %663 = vmatpush1.bf16.msra.mxu0 %v641
          %664 = vmatprep.subr.bf16.mxu0 0
          %665 = vmatpush2.bf16.msra.mxu0 0
          %666 = vmatprep.subr.bf16.mxu0 0
          %667 = vmatpush2.bf16.msra.mxu0 0
          %668 = vmatprep.subr.bf16.mxu0 0
          %669 = vmatpush2.bf16.msra.mxu0 0
          %670 = vmatprep.subr.bf16.mxu0 0
          %671 = vmatpush2.bf16.msra.mxu0 0
          %672 = vmatprep.subr.bf16.mxu0 0
          %673 = vmatpush2.bf16.msra.mxu0 0
          %674 = vmatprep.subr.bf16.mxu0 0
          %675 = vmatpush2.bf16.msra.mxu0 0
          %676 = vmatprep.subr.bf16.mxu0 0
          %677 = vmatpush2.bf16.msra.mxu0 0
          %678 = vmatprep.subr.bf16.mxu0 0
          %679 = vmatpush2.bf16.msra.mxu0 0
          %680 = vmatprep.mubr.bf16.mxu0 0
          %681 = vmatmul.mubr.bf16.gmra.mxu0 %v646
          %v682 = vpop.f32.mrf.mxu0
          %v683 = vadd.f32 %v627, %v682
          %v684 = vpop.f32.mrf.mxu0
          %v685 = vpop.f32.mrf.mxu0
          %v686 = vpop.f32.mrf.mxu0
          %687 = vdwg.mxu0
          %v688 = vmax.f32 %v683, 0.0
          %v689 = vpack.c.bf16 %v688, %v688
          %v690 = vld [vmem:[%s6] sm:$0xf]
          %v691 = vld [vmem:[%s6 + $0x4] sm:$0xf]
          %v692 = vld [vmem:[%s6 + $0x8] sm:$0xf]
          %v693 = vld [vmem:[%s6 + $0xc] sm:$0xf]
          %v694 = vld [vmem:[%s6 + $0x10] sm:$0xf]
          %v695 = vld [vmem:[%s6 + $0x14] sm:$0xf]
          %v696 = vld [vmem:[%s6 + $0x18] sm:$0xf]
          %v697 = vld [vmem:[%s6 + $0x1c] sm:$0xf]
          %v698 = vld [vmem:[%s6 + $0x20] sm:$0xf]
          %v699 = vld [vmem:[%s6 + $0x24] sm:$0xf]
          %v700 = vld [vmem:[%s6 + $0x28] sm:$0xf]
          %v701 = vld [vmem:[%s6 + $0x2c] sm:$0xf]
          %v702 = vld [vmem:[%s6 + $0x30] sm:$0xf]
          %v703 = vld [vmem:[%s6 + $0x34] sm:$0xf]
          %v704 = vld [vmem:[%s6 + $0x38] sm:$0xf]
          %v705 = vld [vmem:[%s6 + $0x3c] sm:$0xf]
          %v722 = vunpack.c.l.b16 %v690
          %v723 = vunpack.c.l.b16 %v691
          %v724 = vunpack.c.l.b16 %v692
          %v725 = vunpack.c.l.b16 %v693
          %v726 = vunpack.c.l.b16 %v694
          %v727 = vunpack.c.l.b16 %v695
          %v728 = vunpack.c.l.b16 %v696
          %v729 = vunpack.c.l.b16 %v697
          %v730 = vunpack.c.l.b16 %v698
          %v731 = vunpack.c.l.b16 %v699
          %v732 = vunpack.c.l.b16 %v700
          %v733 = vunpack.c.l.b16 %v701
          %v734 = vunpack.c.l.b16 %v702
          %v735 = vunpack.c.l.b16 %v703
          %v736 = vunpack.c.l.b16 %v704
          %v737 = vunpack.c.l.b16 %v705
          %v738 = vpack.c.b16 %v723, %v722
          %v739 = vpack.c.b16 %v725, %v724
          %v740 = vpack.c.b16 %v727, %v726
          %v741 = vpack.c.b16 %v729, %v728
          %v742 = vpack.c.b16 %v731, %v730
          %v743 = vpack.c.b16 %v733, %v732
          %v744 = vpack.c.b16 %v735, %v734
          %v745 = vpack.c.b16 %v737, %v736
          %754 = vmatprep.subr.bf16.mxu0 0
          %755 = vmatpush1.bf16.msra.mxu0 %v745
          %756 = vmatprep.subr.bf16.mxu0 0
          %757 = vmatpush1.bf16.msra.mxu0 %v744
          %758 = vmatprep.subr.bf16.mxu0 0
          %759 = vmatpush1.bf16.msra.mxu0 %v743
          %760 = vmatprep.subr.bf16.mxu0 0
          %761 = vmatpush1.bf16.msra.mxu0 %v742
          %762 = vmatprep.subr.bf16.mxu0 0
          %763 = vmatpush1.bf16.msra.mxu0 %v741
          %764 = vmatprep.subr.bf16.mxu0 0
          %765 = vmatpush1.bf16.msra.mxu0 %v740
          %766 = vmatprep.subr.bf16.mxu0 0
          %767 = vmatpush1.bf16.msra.mxu0 %v739
          %768 = vmatprep.subr.bf16.mxu0 0
          %769 = vmatpush1.bf16.msra.mxu0 %v738
          %770 = vmatprep.subr.bf16.mxu0 0
          %771 = vmatpush2.bf16.msra.mxu0 0
          %772 = vmatprep.subr.bf16.mxu0 0
          %773 = vmatpush2.bf16.msra.mxu0 0
          %774 = vmatprep.subr.bf16.mxu0 0
          %775 = vmatpush2.bf16.msra.mxu0 0
          %776 = vmatprep.subr.bf16.mxu0 0
          %777 = vmatpush2.bf16.msra.mxu0 0
          %778 = vmatprep.subr.bf16.mxu0 0
          %779 = vmatpush2.bf16.msra.mxu0 0
          %780 = vmatprep.subr.bf16.mxu0 0
          %781 = vmatpush2.bf16.msra.mxu0 0
          %782 = vmatprep.subr.bf16.mxu0 0
          %783 = vmatpush2.bf16.msra.mxu0 0
          %784 = vmatprep.subr.bf16.mxu0 0
          %785 = vmatpush2.bf16.msra.mxu0 0
          %786 = vmatprep.mubr.bf16.mxu0 0
          %787 = vmatmul.mubr.bf16.gmra.mxu0 %v689
          %v788 = vpop.f32.mrf.mxu0
          %v789 = vadd.f32 0.0, %v788
          %v790 = vpop.f32.mrf.mxu0
          %v791 = vpop.f32.mrf.mxu0
          %v792 = vpop.f32.mrf.mxu0
          %793 = vdwg.mxu0
          %v794 = vpack.c.bf16 %v789, %v789
          %795 = vst [vmem:[%s350] sm:$0xf] %v794
        $region60: #{tpu_custom_call.1} parent=47 // pred_fallthru
          _
        %s796 = sand.u32 %s213, 1
        %s797 = scalar_lea.sflag [#allocation5], %s796
        %s798 = sand.u32 %s213, 1
        %s799 = smul.addr %s798, 4
        %s800 = scalar_lea.vmem [#allocation6], %s799
        // Predicated region
        $region61: #{tpu_custom_call.1} parent=47 // pred_check
          %p801 = pneg %p223
        $region62: #{tpu_custom_call.1} parent=47 // pred_check_branch
          %803 = sbr.rel (%p801) target = $region64
        $region63: #{tpu_custom_call.1} parent=47 // pred_region
          %s805 = ssub.s32 64, 64
          %806 = vsyncadd %s797, %s805
          %s807 = smul.addr %s28, 64
          %s808 = scalar_lea.hbm %s7, %s807
          %s810 = sshll.u32 %s800, 4
          %s811 = int_to_ptr.vmem [resolvable:$true] %s810
          %813 = dma.vmem_to_hbm [thread:$0]  %s811, 64, %s808, %s797
        $region64: #{tpu_custom_call.1} parent=47 // pred_fallthru
          _
      $region48: #{tpu_custom_call.1} parent=5 // pred_fallthru
        _
      %p814 = scmp.le.s32.totalorder 2, %s19
      // Predicated region
      $region65: #{tpu_custom_call.1} parent=5 // pred_check
        %p815 = pneg %p814
      $region66: #{tpu_custom_call.1} parent=5 // pred_check_branch
        %817 = sbr.rel (%p815) target = $region68
      $region67: #{tpu_custom_call.1} parent=5 // pred_region
        %s818 = ssub.s32 %s19, 2
        // Predicated region
        $region69: #{tpu_custom_call.1} parent=67 // pred_check
          %p819 = pneg %p229
        $region70: #{tpu_custom_call.1} parent=67 // pred_check_branch
          %821 = sbr.rel (%p819) target = $region72
        $region71: #{tpu_custom_call.1} parent=67 // pred_region
          %s822 = sand.u32 %s214, 1
          %s823 = scalar_lea.sflag [#allocation5], %s822
          %s824 = sand.u32 %s214, 1
          %s825 = smul.addr %s824, 4
          %s826 = scalar_lea.vmem [#allocation6], %s825
          %827 = dma.done %s823, 64
        $region72: #{tpu_custom_call.1} parent=67 // pred_fallthru
          _
      $region68: #{tpu_custom_call.1} parent=5 // pred_fallthru
        _
    $region6: #{tpu_custom_call.1} parent=1 // loop_footer
      %s23 = sadd.s32 1, %s19
    $region7: #{tpu_custom_call.1} parent=1 // loop_footer_branch
      %18 = sbr.rel target = $region3
    $region8: #{tpu_custom_call.1} parent=1 // loop_exit
      _
    %828 = vsyncpa [#allocation4], 1
    %s829 = scalar_lea.sflag [#allocation4], 1
    %830 = vsyncpa %s829, 1
    %831 = vsyncpa [#allocation5], 1
    %s832 = scalar_lea.sflag [#allocation5], 1
    %833 = vsyncpa %s832, 1

</llo_original>
